<compile_context>
chip_gen: v7x
topology: tpu7x:2x2x1
jax: 0.10.0
libtpu: 0.0.40
codegen_flags: <defaults>
</compile_context>

<pallas_src>
import functools

import jax
import jax.numpy as jnp
from jax.experimental import pallas as pl
from jax.experimental.pallas import tpu as pltpu


def _round_up(v, m):
    return (v + m - 1) // m * m


def _pad2(a, rows, cols):
    return jnp.pad(a, ((0, rows - a.shape[0]), (0, cols - a.shape[1])))


def _graphconv_kernel(a_ref, x_ref, wrel_ref, wroot_ref, b_ref, o_ref,
                      acc_ref, root_ref, *, apply_relu, tile_n, tile_k):
    i = pl.program_id(0)          # destination row tile ("parallel")
    k = pl.program_id(1)          # source / reduction tile ("arbitrary")
    nk = pl.num_programs(1)

    # k == 0: zero the aggregation accumulator and compute the root + bias
    # contribution for this row tile (balances MXU work across steps and
    # keeps the epilogue short).
    @pl.when(k == 0)
    def _init():
        acc_ref[...] = jnp.zeros_like(acc_ref)
        off_i = pl.multiple_of(i * tile_n, tile_n)
        x_rows = x_ref[pl.ds(off_i, tile_n), :].astype(jnp.float32)
        root_ref[...] = jnp.dot(x_rows, wroot_ref[...],
                                preferred_element_type=jnp.float32) + b_ref[...]

    # Partial neighbor aggregation: (tile_n, tile_k) @ (tile_k, f_in).
    # A arrives as int8 (exact small-integer edge counts); the int8 -> bf16
    # cast is cheap VPU work hidden under the A DMA, and the dot itself runs
    # bf16 x bf16 on the MXU with an f32 accumulator.
    off_k = pl.multiple_of(k * tile_k, tile_k)
    a_bf16 = a_ref[...].astype(jnp.bfloat16)
    x_chunk = x_ref[pl.ds(off_k, tile_k), :]
    acc_ref[...] += jnp.dot(a_bf16, x_chunk,
                            preferred_element_type=jnp.float32)

    # Epilogue on the last reduction step: project aggregation, add root+bias,
    # (optional) relu, lane-dense store.
    @pl.when(k == nk - 1)
    def _finalize():
        out = jnp.dot(acc_ref[...], wrel_ref[...],
                      preferred_element_type=jnp.float32) + root_ref[...]
        if apply_relu:
            out = jnp.maximum(out, 0.0)
        o_ref[...] = out.astype(o_ref.dtype)


def graph_conv(a, x, w_rel, w_root, b, *, apply_relu, out_dtype,
               tile_n, tile_k):
    """One GraphConv layer on padded operands.

    a:      (n_pad, n_pad) int8 dense adjacency (A[dst, src] = multiplicity)
    x:      (n_pad, f_in_pad) bf16 node features (VMEM-resident in-kernel)
    w_*:    (f_in_pad, f_out_pad) f32, b: (1, f_out_pad) f32
    returns (n_pad, f_out_pad) out_dtype
    """
    n_pad, f_in = x.shape
    f_out = w_rel.shape[1]
    assert a.shape == (n_pad, n_pad)
    assert n_pad % tile_n == 0 and n_pad % tile_k == 0
    assert f_in % 128 == 0 and f_out % 128 == 0, "pad features to lane width"

    grid = (n_pad // tile_n, n_pad // tile_k)
    kernel = functools.partial(_graphconv_kernel, apply_relu=apply_relu,
                               tile_n=tile_n, tile_k=tile_k)
    return pl.pallas_call(
        kernel,
        out_shape=jax.ShapeDtypeStruct((n_pad, f_out), out_dtype),
        grid_spec=pltpu.PrefetchScalarGridSpec(
            num_scalar_prefetch=0,
            grid=grid,
            in_specs=[
                pl.BlockSpec((tile_n, tile_k), lambda i, k: (i, k)),  # A tile
                pl.BlockSpec((n_pad, f_in), lambda i, k: (0, 0)),     # x (resident)
                pl.BlockSpec((f_in, f_out), lambda i, k: (0, 0)),     # W_rel
                pl.BlockSpec((f_in, f_out), lambda i, k: (0, 0)),     # W_root
                pl.BlockSpec((1, f_out), lambda i, k: (0, 0)),        # bias
            ],
            out_specs=pl.BlockSpec((tile_n, f_out), lambda i, k: (i, 0)),
            scratch_shapes=[
                pltpu.VMEM((tile_n, f_in), jnp.float32),    # A@X accumulator
                pltpu.VMEM((tile_n, f_out), jnp.float32),   # root + bias term
            ]),
        compiler_params=pltpu.CompilerParams(
            dimension_semantics=("parallel", "arbitrary"),
            vmem_limit_bytes=48 * 1024 * 1024),
    )(a, x, w_rel, w_root, b)


def init_params(key, in_channels, hidden_channels, out_channels):
    def glorot(k, fan_in, fan_out):
        lim = (6.0 / (fan_in + fan_out)) ** 0.5
        return jax.random.uniform(k, (fan_in, fan_out), jnp.float32, -lim, lim)

    dims = {
        "conv1": (in_channels, hidden_channels),
        "conv2": (hidden_channels, hidden_channels),
        "conv4": (hidden_channels, out_channels),
    }
    params = {}
    keys = jax.random.split(key, 3 * len(dims))
    for i, (name, (fi, fo)) in enumerate(dims.items()):
        w_rel = glorot(keys[3 * i], fi, fo)
        w_root = glorot(keys[3 * i + 1], fi, fo)
        blim = 1.0 / (fi ** 0.5)
        b = jax.random.uniform(keys[3 * i + 2], (1, fo), jnp.float32, -blim, blim)
        params[name] = (w_rel, w_root, b)
    return params


def gnn_encoder_forward(x, edge_index, params, *, tile_n=256, tile_k=2048):
    n, f_in = x.shape
    out_ch = params["conv4"][0].shape[1]

    # --- tile selection -----------------------------------------------------
    n128 = _round_up(n, 128)
    tile_n = min(tile_n, n128)
    if tile_n > 128 and n128 < 2 * tile_n:
        tile_n = 128                      # keep >=2 row tiles (v7x megacore)
    tile_k = min(tile_k, _round_up(n, tile_n))
    tile_k = max(tile_n, (tile_k // tile_n) * tile_n)   # multiple of tile_n
    n_pad = _round_up(n, tile_k)

    # --- dense adjacency, built directly in int8 ----------------------------
    # A[dst, src] = edge multiplicity (message flow j -> i); exact for
    # multiplicities <= 127 (plain graphs / small multigraphs).
    src, dst = edge_index[0], edge_index[1]
    a = jnp.zeros((n_pad, n_pad), jnp.int8).at[dst, src].add(1)

    # --- lane-dense padded bf16 features ------------------------------------
    x_p = _pad2(x.astype(jnp.bfloat16), n_pad, _round_up(f_in, 128))

    def padded_layer(p):
        w_rel, w_root, b = p
        fi, fo = w_rel.shape
        fip, fop = _round_up(fi, 128), _round_up(fo, 128)
        return (_pad2(w_rel, fip, fop), _pad2(w_root, fip, fop),
                _pad2(b, 1, fop))

    # Intermediate activations stay bf16 (halves inter-layer HBM traffic and
    # feeds the next layer an MXU-native dtype); only the final output is f32.
    h = graph_conv(a, x_p, *padded_layer(params["conv1"]), apply_relu=True,
                   out_dtype=jnp.bfloat16, tile_n=tile_n, tile_k=tile_k)
    h = graph_conv(a, h, *padded_layer(params["conv2"]), apply_relu=True,
                   out_dtype=jnp.bfloat16, tile_n=tile_n, tile_k=tile_k)
    h = graph_conv(a, h, *padded_layer(params["conv4"]), apply_relu=False,
                   out_dtype=jnp.float32, tile_n=tile_n, tile_k=tile_k)
    return h[:n, :out_ch]


def _reference_forward(x, edge_index, params):
    n = x.shape[0]
    src, dst = edge_index[0], edge_index[1]
    a = jnp.zeros((n, n), jnp.float32).at[dst, src].add(1.0)

    def layer(h, p, relu):
        w_rel, w_root, b = p
        out = (a @ h) @ w_rel + h @ w_root + b
        return jnp.maximum(out, 0.0) if relu else out

    h = layer(x, params["conv1"], True)
    h = layer(h, params["conv2"], True)
    return layer(h, params["conv4"], False)


if __name__ == "__main__":
    N, IN_CH, HIDDEN, OUT_CH, E = 16, 8, 32, 16, 48

    key = jax.random.PRNGKey(0)
    k_x, k_e, k_p = jax.random.split(key, 3)

    x = jax.random.normal(k_x, (N, IN_CH), jnp.float32)
    edge_index = jax.random.randint(k_e, (2, E), 0, N, jnp.int32)

    params = init_params(k_p, IN_CH, HIDDEN, OUT_CH)

    out = gnn_encoder_forward(x, edge_index, params)
    out = jax.block_until_ready(out)

    ref = _reference_forward(x, edge_index, params)
    assert out.shape == (N, OUT_CH)
    # bf16 activations / bf16 MXU aggregation path => loosened tolerance vs
    # the f32 reference (still ~1e-2-level agreement over 3 stacked layers).
    assert jnp.allclose(out, ref, atol=5e-2, rtol=5e-2), "mismatch vs JAX reference"

    print("KERNEL_OK")
</pallas_src>

<mosaic_0001>
module attributes {stable_mosaic.version = 11 : i64} {
  func.func @_graphconv_kernel(%arg0: i32, %arg1: i32, %arg2: memref<128x128xi8, #tpu.memory_space<vmem>>, %arg3: memref<128x128xbf16, #tpu.memory_space<vmem>>, %arg4: memref<128x128xf32, #tpu.memory_space<vmem>>, %arg5: memref<128x128xf32, #tpu.memory_space<vmem>>, %arg6: memref<1x128xf32, #tpu.memory_space<vmem>>, %arg7: memref<128x128xbf16, #tpu.memory_space<vmem>>, %arg8: memref<128x128xf32, #tpu.memory_space<vmem>>, %arg9: memref<128x128xf32, #tpu.memory_space<vmem>>) attributes {dimension_semantics = [#tpu.dimension_semantics<parallel>, #tpu.dimension_semantics<arbitrary>], iteration_bounds = array<i64: 1, 1>, scalar_prefetch = 0 : i64, scratch_operands = 2 : i64, tpu.core_type = #tpu.core_type<tc>, window_params = [{transform_indices = @transform_0, window_bounds = array<i64: 128, 128>}, {pipeline_mode = #tpu.pipeline_mode<synchronous>, transform_indices = @transform_1, window_bounds = array<i64: 128, 128>}, {pipeline_mode = #tpu.pipeline_mode<synchronous>, transform_indices = @transform_2, window_bounds = array<i64: 128, 128>}, {pipeline_mode = #tpu.pipeline_mode<synchronous>, transform_indices = @transform_3, window_bounds = array<i64: 128, 128>}, {pipeline_mode = #tpu.pipeline_mode<synchronous>, transform_indices = @transform_4, window_bounds = array<i64: 1, 128>}, {transform_indices = @transform_5, window_bounds = array<i64: 128, 128>}]} {
    %c0_i32 = arith.constant 0 : i32
    %0 = arith.cmpi eq, %arg1, %c0_i32 : i32
    %1 = arith.extui %0 : i1 to i32
    %c0_i32_0 = arith.constant 0 : i32
    %2 = arith.cmpi ne, %1, %c0_i32_0 : i32
    scf.if %2 {
      %cst_9 = arith.constant 0.000000e+00 : f32
      %16 = vector.broadcast %cst_9 : f32 to vector<128x128xf32>
      %c0_10 = arith.constant 0 : index
      %c0_11 = arith.constant 0 : index
      %17 = vector.load %arg8[%c0_10, %c0_11] : memref<128x128xf32, #tpu.memory_space<vmem>>, vector<128x128xf32>
      tpu.vector_store %arg8[%c0_10, %c0_11], %16 {strides = array<i32>} : memref<128x128xf32, #tpu.memory_space<vmem>>, vector<128x128xf32>,
      %c128_i32_12 = arith.constant 128 : i32
      %18 = arith.muli %arg0, %c128_i32_12 : i32
      %19 = tpu.assume_multiple %18, 128 : i32
      %20 = arith.index_cast %19 : i32 to index
      %c0_13 = arith.constant 0 : index
      %21 = vector.load %arg3[%20, %c0_13] : memref<128x128xbf16, #tpu.memory_space<vmem>>, vector<128x128xbf16>
      %22 = arith.extf %21 : vector<128x128xbf16> to vector<128x128xf32>
      %c0_14 = arith.constant 0 : index
      %c0_15 = arith.constant 0 : index
      %23 = vector.load %arg5[%c0_14, %c0_15] : memref<128x128xf32, #tpu.memory_space<vmem>>, vector<128x128xf32>
      %cst_16 = arith.constant dense<0.000000e+00> : vector<128x128xf32>
      %24 = tpu.matmul %22, %23, %cst_16 {dimension_numbers = #tpu.dot_dimension_numbers<[1], [0], [0], [1], [0, 0, 1, 1], [], []>} : vector<128x128xf32>, vector<128x128xf32>, vector<128x128xf32> -> vector<128x128xf32>
      %c0_17 = arith.constant 0 : index
      %c0_18 = arith.constant 0 : index
      %25 = vector.load %arg6[%c0_17, %c0_18] : memref<1x128xf32, #tpu.memory_space<vmem>>, vector<1x128xf32>
      %26 = vector.broadcast %25 : vector<1x128xf32> to vector<128x128xf32>
      %27 = arith.addf %24, %26 : vector<128x128xf32>
      %c0_19 = arith.constant 0 : index
      %c0_20 = arith.constant 0 : index
      %28 = vector.load %arg9[%c0_19, %c0_20] : memref<128x128xf32, #tpu.memory_space<vmem>>, vector<128x128xf32>
      tpu.vector_store %arg9[%c0_19, %c0_20], %27 {strides = array<i32>} : memref<128x128xf32, #tpu.memory_space<vmem>>, vector<128x128xf32>,
    } else {
    }
    %c128_i32 = arith.constant 128 : i32
    %3 = arith.muli %arg1, %c128_i32 : i32
    %4 = tpu.assume_multiple %3, 128 : i32
    %c0 = arith.constant 0 : index
    %c0_1 = arith.constant 0 : index
    %5 = vector.load %arg2[%c0, %c0_1] : memref<128x128xi8, #tpu.memory_space<vmem>>, vector<128x128xi8>
    %6 = arith.sitofp %5 : vector<128x128xi8> to vector<128x128xbf16>
    %7 = arith.index_cast %4 : i32 to index
    %c0_2 = arith.constant 0 : index
    %8 = vector.load %arg3[%7, %c0_2] : memref<128x128xbf16, #tpu.memory_space<vmem>>, vector<128x128xbf16>
    %c0_3 = arith.constant 0 : index
    %c0_4 = arith.constant 0 : index
    %9 = vector.load %arg8[%c0_3, %c0_4] : memref<128x128xf32, #tpu.memory_space<vmem>>, vector<128x128xf32>
    %cst = arith.constant dense<0.000000e+00> : vector<128x128xf32>
    %10 = tpu.matmul %6, %8, %cst {dimension_numbers = #tpu.dot_dimension_numbers<[1], [0], [0], [1], [0, 0, 1, 1], [], []>} : vector<128x128xbf16>, vector<128x128xbf16>, vector<128x128xf32> -> vector<128x128xf32>
    %11 = arith.addf %9, %10 : vector<128x128xf32>
    %c0_5 = arith.constant 0 : index
    %c0_6 = arith.constant 0 : index
    %12 = vector.load %arg8[%c0_5, %c0_6] : memref<128x128xf32, #tpu.memory_space<vmem>>, vector<128x128xf32>
    tpu.vector_store %arg8[%c0_5, %c0_6], %11 {strides = array<i32>} : memref<128x128xf32, #tpu.memory_space<vmem>>, vector<128x128xf32>,
    %c0_i32_7 = arith.constant 0 : i32
    %13 = arith.cmpi eq, %arg1, %c0_i32_7 : i32
    %14 = arith.extui %13 : i1 to i32
    %c0_i32_8 = arith.constant 0 : i32
    %15 = arith.cmpi ne, %14, %c0_i32_8 : i32
    scf.if %15 {
      %c0_9 = arith.constant 0 : index
      %c0_10 = arith.constant 0 : index
      %16 = vector.load %arg8[%c0_9, %c0_10] : memref<128x128xf32, #tpu.memory_space<vmem>>, vector<128x128xf32>
      %c0_11 = arith.constant 0 : index
      %c0_12 = arith.constant 0 : index
      %17 = vector.load %arg4[%c0_11, %c0_12] : memref<128x128xf32, #tpu.memory_space<vmem>>, vector<128x128xf32>
      %cst_13 = arith.constant dense<0.000000e+00> : vector<128x128xf32>
      %18 = tpu.matmul %16, %17, %cst_13 {dimension_numbers = #tpu.dot_dimension_numbers<[1], [0], [0], [1], [0, 0, 1, 1], [], []>} : vector<128x128xf32>, vector<128x128xf32>, vector<128x128xf32> -> vector<128x128xf32>
      %c0_14 = arith.constant 0 : index
      %c0_15 = arith.constant 0 : index
      %19 = vector.load %arg9[%c0_14, %c0_15] : memref<128x128xf32, #tpu.memory_space<vmem>>, vector<128x128xf32>
      %20 = arith.addf %18, %19 : vector<128x128xf32>
      %cst_16 = arith.constant 0.000000e+00 : f32
      %21 = vector.broadcast %cst_16 : f32 to vector<128x128xf32>
      %22 = arith.maximumf %20, %21 : vector<128x128xf32>
      %23 = arith.truncf %22 : vector<128x128xf32> to vector<128x128xbf16>
      %c0_17 = arith.constant 0 : index
      %c0_18 = arith.constant 0 : index
      %24 = vector.load %arg7[%c0_17, %c0_18] : memref<128x128xbf16, #tpu.memory_space<vmem>>, vector<128x128xbf16>
      tpu.vector_store %arg7[%c0_17, %c0_18], %23 {strides = array<i32>} : memref<128x128xbf16, #tpu.memory_space<vmem>>, vector<128x128xbf16>,
    } else {
    }
    return
  }
  func.func @transform_0(%arg0: i32, %arg1: i32) -> (i32, i32) {
    %c0_i32 = arith.constant 0 : i32
    return %arg0, %arg1 : i32, i32
  }
  func.func @transform_1(%arg0: i32, %arg1: i32) -> (i32, i32) {
    %c0_i32 = arith.constant 0 : i32
    %c0_i32_0 = arith.constant 0 : i32
    %c0_i32_1 = arith.constant 0 : i32
    return %c0_i32, %c0_i32_0 : i32, i32
  }
  func.func @transform_2(%arg0: i32, %arg1: i32) -> (i32, i32) {
    %c0_i32 = arith.constant 0 : i32
    %c0_i32_0 = arith.constant 0 : i32
    %c0_i32_1 = arith.constant 0 : i32
    return %c0_i32, %c0_i32_0 : i32, i32
  }
  func.func @transform_3(%arg0: i32, %arg1: i32) -> (i32, i32) {
    %c0_i32 = arith.constant 0 : i32
    %c0_i32_0 = arith.constant 0 : i32
    %c0_i32_1 = arith.constant 0 : i32
    return %c0_i32, %c0_i32_0 : i32, i32
  }
  func.func @transform_4(%arg0: i32, %arg1: i32) -> (i32, i32) {
    %c0_i32 = arith.constant 0 : i32
    %c0_i32_0 = arith.constant 0 : i32
    %c0_i32_1 = arith.constant 0 : i32
    return %c0_i32, %c0_i32_0 : i32, i32
  }
  func.func @transform_5(%arg0: i32, %arg1: i32) -> (i32, i32) {
    %c0_i32 = arith.constant 0 : i32
    %c0_i32_0 = arith.constant 0 : i32
    return %arg0, %c0_i32 : i32, i32
  }
}

</mosaic_0001>

<llo_original>
// kernel: tpu_custom_call.1
$region0: #{tpu_custom_call.1}
  #allocation0 [shape = 'u32[]', space=smem, size = 0x4, offset = 0x4, fixed_abs, tag = 'smem constant byte address 0x4 - core index']
  #allocation1 [shape = 'u32[144,128]{1,0:T(1,128)}', space=vmem, size = 0x12000, scoped, tag = 'internal scratch']
  #allocation2 [shape = 'f32[128,128]{1,0:T(8,128)}', space=vmem, size = 0x10000, scoped, tag = 'scratch operand']
  #allocation3 [shape = 'f32[128,128]{1,0:T(8,128)}', space=vmem, size = 0x10000, scoped, tag = 'scratch operand']
  %s0 = inlined_call_operand.hbm [shape: s8[128,128], index: 0, kind: input, shape index: {}]
  %s1 = inlined_call_operand.hbm [shape: bf16[128,128], index: 1, kind: input, shape index: {}]
  %s2 = inlined_call_operand.hbm [shape: f32[128,128], index: 2, kind: input, shape index: {}]
  %s3 = inlined_call_operand.hbm [shape: f32[128,128], index: 3, kind: input, shape index: {}]
  %s4 = inlined_call_operand.vmem [shape: f32[1,128], index: 4, kind: input, shape index: {}]
  %s5 = inlined_call_operand.hbm [shape: bf16[128,128], index: 5, kind: output, shape index: {}]
  %s6 = sld [smem:[#allocation0]]
  $region54: #{tpu_custom_call.1} parent=0
    _
  %s8 = ssub.s32 1, %s6
  %s9 = scalar_select 0, %s8, %s6
  $region1: #{tpu_custom_call.1} parent=0
    #allocation4 [shape = 'u8[16384]{0}', space=vmem, size = 0x4000, scoped, tag = 'input window, operand 0, single buffered']
    #allocation5 [shape = 's32[1]{0}', space=sflag, size = 0x4, scoped, tag = 'scoped memory for tpu_custom_call.1']
    #allocation6 [shape = 's32[1]{0}', space=sflag, size = 0x4, scoped, tag = 'scoped memory for tpu_custom_call.1']
    #allocation7 [shape = 'u8[32768]{0}', space=vmem, size = 0x8000, scoped, tag = 'input window, operand 1, single buffered']
    #allocation8 [shape = 's32[1]{0}', space=sflag, size = 0x4, scoped, tag = 'scoped memory for tpu_custom_call.1']
    #allocation9 [shape = 'u8[65536]{0}', space=vmem, size = 0x10000, scoped, tag = 'input window, operand 2, single buffered']
    #allocation10 [shape = 'u8[65536]{0}', space=vmem, size = 0x10000, scoped, tag = 'input window, operand 3, single buffered']
    #allocation11 [shape = 's32[1]{0}', space=sflag, size = 0x4, scoped, tag = 'scoped memory for tpu_custom_call.1']
    #allocation12 [shape = 'u8[32768]{0}', space=vmem, size = 0x8000, scoped, tag = 'output window, operand 0, single buffered']
    %10 = vsyncpa [#allocation5], 0
    %11 = vsyncpa [#allocation8], 0
    %12 = vsyncpa [#allocation11], 0
    %13 = vsyncpa [#allocation6], 0
    // Predicated region
    $region2: #{tpu_custom_call.1} parent=1 // pred_check
      _
    $region3: #{tpu_custom_call.1} parent=1 // pred_check_branch
      %15 = sbr.rel (0) target = $region5
    $region4: #{tpu_custom_call.1} parent=1 // pred_region
      %s17 = ssub.s32 512, 512
      %18 = vsyncadd [#allocation5], %s17
      %s19 = sshll.u32 [#allocation4], 4
      %s20 = int_to_ptr.vmem [resolvable:$true] %s19
      %25 = dma.hbm_to_vmem [thread:$0]  %s0, 512, %s20, [#allocation5], 128, 128, 8
    $region5: #{tpu_custom_call.1} parent=1 // pred_fallthru
      _
    // Predicated region
    $region6: #{tpu_custom_call.1} parent=1 // pred_check
      _
    $region7: #{tpu_custom_call.1} parent=1 // pred_check_branch
      %27 = sbr.rel (0) target = $region9
    $region8: #{tpu_custom_call.1} parent=1 // pred_region
      %s29 = ssub.s32 1024, 1024
      %30 = vsyncadd [#allocation8], %s29
      %s31 = sshll.u32 [#allocation7], 4
      %s32 = int_to_ptr.vmem [resolvable:$true] %s31
      %37 = dma.hbm_to_vmem [thread:$0]  %s1, 1024, %s32, [#allocation8], 64, 64, 4
    $region9: #{tpu_custom_call.1} parent=1 // pred_fallthru
      _
    // Predicated region
    $region10: #{tpu_custom_call.1} parent=1 // pred_check
      _
    $region11: #{tpu_custom_call.1} parent=1 // pred_check_branch
      %39 = sbr.rel (0) target = $region13
    $region12: #{tpu_custom_call.1} parent=1 // pred_region
      %s41 = ssub.s32 2048, 2048
      %42 = vsyncadd [#allocation8], %s41
      %s43 = sshll.u32 [#allocation9], 4
      %s44 = int_to_ptr.vmem [resolvable:$true] %s43
      %49 = dma.hbm_to_vmem [thread:$0]  %s2, 2048, %s44, [#allocation8], 128, 128, 8
    $region13: #{tpu_custom_call.1} parent=1 // pred_fallthru
      _
    // Predicated region
    $region14: #{tpu_custom_call.1} parent=1 // pred_check
      _
    $region15: #{tpu_custom_call.1} parent=1 // pred_check_branch
      %51 = sbr.rel (0) target = $region17
    $region16: #{tpu_custom_call.1} parent=1 // pred_region
      %s53 = ssub.s32 2048, 2048
      %54 = vsyncadd [#allocation11], %s53
      %s55 = sshll.u32 [#allocation10], 4
      %s56 = int_to_ptr.vmem [resolvable:$true] %s55
      %61 = dma.hbm_to_vmem [thread:$0]  %s3, 2048, %s56, [#allocation11], 128, 128, 8
    $region17: #{tpu_custom_call.1} parent=1 // pred_fallthru
      _
    // Predicated region
    $region18: #{tpu_custom_call.1} parent=1 // pred_check
      _
    $region19: #{tpu_custom_call.1} parent=1 // pred_check_branch
      %63 = sbr.rel (0) target = $region21
    $region20: #{tpu_custom_call.1} parent=1 // pred_region
      _
    $region21: #{tpu_custom_call.1} parent=1 // pred_fallthru
      _
    // Predicated region
    $region22: #{tpu_custom_call.1} parent=1 // pred_check
      _
    $region23: #{tpu_custom_call.1} parent=1 // pred_check_branch
      %65 = sbr.rel (0) target = $region25
    $region24: #{tpu_custom_call.1} parent=1 // pred_region
      %66 = dma.done [#allocation5], 512
    $region25: #{tpu_custom_call.1} parent=1 // pred_fallthru
      _
    // Predicated region
    $region26: #{tpu_custom_call.1} parent=1 // pred_check
      _
    $region27: #{tpu_custom_call.1} parent=1 // pred_check_branch
      %68 = sbr.rel (0) target = $region29
    $region28: #{tpu_custom_call.1} parent=1 // pred_region
      %69 = dma.done [#allocation8], 1024
    $region29: #{tpu_custom_call.1} parent=1 // pred_fallthru
      _
    // Predicated region
    $region30: #{tpu_custom_call.1} parent=1 // pred_check
      _
    $region31: #{tpu_custom_call.1} parent=1 // pred_check_branch
      %71 = sbr.rel (0) target = $region33
    $region32: #{tpu_custom_call.1} parent=1 // pred_region
      %72 = dma.done [#allocation8], 2048
    $region33: #{tpu_custom_call.1} parent=1 // pred_fallthru
      _
    // Predicated region
    $region34: #{tpu_custom_call.1} parent=1 // pred_check
      _
    $region35: #{tpu_custom_call.1} parent=1 // pred_check_branch
      %74 = sbr.rel (0) target = $region37
    $region36: #{tpu_custom_call.1} parent=1 // pred_region
      %75 = dma.done [#allocation11], 2048
    $region37: #{tpu_custom_call.1} parent=1 // pred_fallthru
      _
    %p77 = scmp.eq.s32.totalorder 0, 0
    // Predicated region
    $region38: #{tpu_custom_call.1} parent=1 // pred_check
      %p78 = pneg %p77
    $region39: #{tpu_custom_call.1} parent=1 // pred_check_branch
      %80 = sbr.rel (%p78) target = $region41
    $region40: #{tpu_custom_call.1} parent=1 // pred_region
      %81 = vst [vmem:[#allocation2] sm:$0xff] 0.0
      %82 = vst [vmem:[#allocation2 + $0x8] sm:$0xff] 0.0
      %83 = vst [vmem:[#allocation2 + $0x10] sm:$0xff] 0.0
      %84 = vst [vmem:[#allocation2 + $0x18] sm:$0xff] 0.0
      %85 = vst [vmem:[#allocation2 + $0x20] sm:$0xff] 0.0
      %86 = vst [vmem:[#allocation2 + $0x28] sm:$0xff] 0.0
      %87 = vst [vmem:[#allocation2 + $0x30] sm:$0xff] 0.0
      %88 = vst [vmem:[#allocation2 + $0x38] sm:$0xff] 0.0
      %89 = vst [vmem:[#allocation2 + $0x40] sm:$0xff] 0.0
      %90 = vst [vmem:[#allocation2 + $0x48] sm:$0xff] 0.0
      %91 = vst [vmem:[#allocation2 + $0x50] sm:$0xff] 0.0
      %92 = vst [vmem:[#allocation2 + $0x58] sm:$0xff] 0.0
      %93 = vst [vmem:[#allocation2 + $0x60] sm:$0xff] 0.0
      %94 = vst [vmem:[#allocation2 + $0x68] sm:$0xff] 0.0
      %95 = vst [vmem:[#allocation2 + $0x70] sm:$0xff] 0.0
      %96 = vst [vmem:[#allocation2 + $0x78] sm:$0xff] 0.0
      %s97 = smul.u32 0, 128
      %s98 = sshra.s32 %s97, 3
      %s99 = sand.u32 %s97, 7
      %s100 = smul.addr %s98, 4
      %s101 = scalar_lea.vmem [#allocation7], %s100
      %v102 = vld [vmem:[%s101] sm:$0xf]
      %v103 = vld [vmem:[%s101 + $0x4] sm:$0xf]
      %v104 = vld [vmem:[%s101 + $0x8] sm:$0xf]
      %v105 = vld [vmem:[%s101 + $0xc] sm:$0xf]
      %v106 = vld [vmem:[%s101 + $0x10] sm:$0xf]
      %v107 = vld [vmem:[%s101 + $0x14] sm:$0xf]
      %v108 = vld [vmem:[%s101 + $0x18] sm:$0xf]
      %v109 = vld [vmem:[%s101 + $0x1c] sm:$0xf]
      %v110 = vld [vmem:[%s101 + $0x20] sm:$0xf]
      %v111 = vld [vmem:[%s101 + $0x24] sm:$0xf]
      %v112 = vld [vmem:[%s101 + $0x28] sm:$0xf]
      %v113 = vld [vmem:[%s101 + $0x2c] sm:$0xf]
      %v114 = vld [vmem:[%s101 + $0x30] sm:$0xf]
      %v115 = vld [vmem:[%s101 + $0x34] sm:$0xf]
      %v116 = vld [vmem:[%s101 + $0x38] sm:$0xf]
      %v117 = vld [vmem:[%s101 + $0x3c] sm:$0xf]
      %v118 = vunpack.c.l.bf16 %v102
      %v119 = vunpack.c.l.bf16 %v103
      %v120 = vunpack.c.l.bf16 %v104
      %v121 = vunpack.c.l.bf16 %v105
      %v122 = vunpack.c.l.bf16 %v106
      %v123 = vunpack.c.l.bf16 %v107
      %v124 = vunpack.c.l.bf16 %v108
      %v125 = vunpack.c.l.bf16 %v109
      %v126 = vunpack.c.l.bf16 %v110
      %v127 = vunpack.c.l.bf16 %v111
      %v128 = vunpack.c.l.bf16 %v112
      %v129 = vunpack.c.l.bf16 %v113
      %v130 = vunpack.c.l.bf16 %v114
      %v131 = vunpack.c.l.bf16 %v115
      %v132 = vunpack.c.l.bf16 %v116
      %v133 = vunpack.c.l.bf16 %v117
      %v134 = vld [vmem:[#allocation10] sm:$0xff]
      %v135 = vld [vmem:[#allocation10 + $0x8] sm:$0xff]
      %v136 = vld [vmem:[#allocation10 + $0x10] sm:$0xff]
      %v137 = vld [vmem:[#allocation10 + $0x18] sm:$0xff]
      %v138 = vld [vmem:[#allocation10 + $0x20] sm:$0xff]
      %v139 = vld [vmem:[#allocation10 + $0x28] sm:$0xff]
      %v140 = vld [vmem:[#allocation10 + $0x30] sm:$0xff]
      %v141 = vld [vmem:[#allocation10 + $0x38] sm:$0xff]
      %v142 = vld [vmem:[#allocation10 + $0x40] sm:$0xff]
      %v143 = vld [vmem:[#allocation10 + $0x48] sm:$0xff]
      %v144 = vld [vmem:[#allocation10 + $0x50] sm:$0xff]
      %v145 = vld [vmem:[#allocation10 + $0x58] sm:$0xff]
      %v146 = vld [vmem:[#allocation10 + $0x60] sm:$0xff]
      %v147 = vld [vmem:[#allocation10 + $0x68] sm:$0xff]
      %v148 = vld [vmem:[#allocation10 + $0x70] sm:$0xff]
      %v149 = vld [vmem:[#allocation10 + $0x78] sm:$0xff]
      %v150 = vld [vmem:[%s4] sm:$0x1]
      %v152 = vlaneseq
      %v153 = vshrl.u32 %v152, 7
      %v154 = vsub.s32 0, %v153
      %v155 = vrot.slane %v150, %v154
      %157 = vmatprep.subr.mxu0 0.0
      %158 = vmatpush1.msra.mxu0 %v134
      %159 = vmatprep.subr.mxu0 0.0
      %160 = vmatpush1.msra.mxu0 %v135
      %161 = vmatprep.subr.mxu0 0.0
      %162 = vmatpush1.msra.mxu0 %v136
      %163 = vmatprep.subr.mxu0 0.0
      %164 = vmatpush1.msra.mxu0 %v137
      %165 = vmatprep.subr.mxu0 0.0
      %166 = vmatpush1.msra.mxu0 %v138
      %167 = vmatprep.subr.mxu0 0.0
      %168 = vmatpush1.msra.mxu0 %v139
      %169 = vmatprep.subr.mxu0 0.0
      %170 = vmatpush1.msra.mxu0 %v140
      %171 = vmatprep.subr.mxu0 0.0
      %172 = vmatpush1.msra.mxu0 %v141
      %173 = vmatprep.subr.mxu0 0.0
      %174 = vmatpush1.msra.mxu0 %v142
      %175 = vmatprep.subr.mxu0 0.0
      %176 = vmatpush1.msra.mxu0 %v143
      %177 = vmatprep.subr.mxu0 0.0
      %178 = vmatpush1.msra.mxu0 %v144
      %179 = vmatprep.subr.mxu0 0.0
      %180 = vmatpush1.msra.mxu0 %v145
      %181 = vmatprep.subr.mxu0 0.0
      %182 = vmatpush1.msra.mxu0 %v146
      %183 = vmatprep.subr.mxu0 0.0
      %184 = vmatpush1.msra.mxu0 %v147
      %185 = vmatprep.subr.mxu0 0.0
      %186 = vmatpush1.msra.mxu0 %v148
      %187 = vmatprep.subr.mxu0 0.0
      %188 = vmatpush1.msra.mxu0 %v149
      %189 = vmatprep.subr.mxu0 0.0
      %190 = vmatpush1.msra.mxu0 0.0
      %191 = vmatprep.subr.mxu0 0.0
      %192 = vmatpush1.msra.mxu0 0.0
      %193 = vmatprep.subr.mxu0 0.0
      %194 = vmatpush1.msra.mxu0 0.0
      %195 = vmatprep.subr.mxu0 0.0
      %196 = vmatpush1.msra.mxu0 0.0
      %197 = vmatprep.subr.mxu0 0.0
      %198 = vmatpush1.msra.mxu0 0.0
      %199 = vmatprep.subr.mxu0 0.0
      %200 = vmatpush1.msra.mxu0 0.0
      %201 = vmatprep.subr.mxu0 0.0
      %202 = vmatpush1.msra.mxu0 0.0
      %203 = vmatprep.subr.mxu0 0.0
      %204 = vmatpush1.msra.mxu0 0.0
      %205 = vmatprep.subr.mxu0 0.0
      %206 = vmatpush1.msra.mxu0 0.0
      %207 = vmatprep.subr.mxu0 0.0
      %208 = vmatpush1.msra.mxu0 0.0
      %209 = vmatprep.subr.mxu0 0.0
      %210 = vmatpush1.msra.mxu0 0.0
      %211 = vmatprep.subr.mxu0 0.0
      %212 = vmatpush1.msra.mxu0 0.0
      %213 = vmatprep.subr.mxu0 0.0
      %214 = vmatpush1.msra.mxu0 0.0
      %215 = vmatprep.subr.mxu0 0.0
      %216 = vmatpush1.msra.mxu0 0.0
      %217 = vmatprep.subr.mxu0 0.0
      %218 = vmatpush1.msra.mxu0 0.0
      %219 = vmatprep.subr.mxu0 0.0
      %220 = vmatpush1.msra.mxu0 0.0
      %221 = vmatprep.mubr.f32.mxu0 0.0
      %222 = vmatmul.mubr.f32.gmra.mrb[0].mxu0 %v118
      %v223 = vpop.f32.mrb[0].mxu0
      %v224 = vadd.f32 %v155, %v223
      %v225 = vpop.f32.mrb[0].mxu0
      %226 = vmatprep.mubr.f32.mxu0 0.0
      %227 = vmatmul.mubr.f32.gmra.mrb[0].mxu0 %v119
      %v228 = vpop.f32.mrb[0].mxu0
      %v229 = vadd.f32 %v155, %v228
      %v230 = vpop.f32.mrb[0].mxu0
      %231 = vmatprep.mubr.f32.mxu0 0.0
      %232 = vmatmul.mubr.f32.gmra.mrb[0].mxu0 %v120
      %v233 = vpop.f32.mrb[0].mxu0
      %v234 = vadd.f32 %v155, %v233
      %v235 = vpop.f32.mrb[0].mxu0
      %236 = vmatprep.mubr.f32.mxu0 0.0
      %237 = vmatmul.mubr.f32.gmra.mrb[0].mxu0 %v121
      %v238 = vpop.f32.mrb[0].mxu0
      %v239 = vadd.f32 %v155, %v238
      %v240 = vpop.f32.mrb[0].mxu0
      %241 = vmatprep.mubr.f32.mxu0 0.0
      %242 = vmatmul.mubr.f32.gmra.mrb[0].mxu0 %v122
      %v243 = vpop.f32.mrb[0].mxu0
      %v244 = vadd.f32 %v155, %v243
      %v245 = vpop.f32.mrb[0].mxu0
      %246 = vmatprep.mubr.f32.mxu0 0.0
      %247 = vmatmul.mubr.f32.gmra.mrb[0].mxu0 %v123
      %v248 = vpop.f32.mrb[0].mxu0
      %v249 = vadd.f32 %v155, %v248
      %v250 = vpop.f32.mrb[0].mxu0
      %251 = vmatprep.mubr.f32.mxu0 0.0
      %252 = vmatmul.mubr.f32.gmra.mrb[0].mxu0 %v124
      %v253 = vpop.f32.mrb[0].mxu0
      %v254 = vadd.f32 %v155, %v253
      %v255 = vpop.f32.mrb[0].mxu0
      %256 = vmatprep.mubr.f32.mxu0 0.0
      %257 = vmatmul.mubr.f32.gmra.mrb[0].mxu0 %v125
      %v258 = vpop.f32.mrb[0].mxu0
      %v259 = vadd.f32 %v155, %v258
      %v260 = vpop.f32.mrb[0].mxu0
      %261 = vmatprep.mubr.f32.mxu0 0.0
      %262 = vmatmul.mubr.f32.gmra.mrb[0].mxu0 %v126
      %v263 = vpop.f32.mrb[0].mxu0
      %v264 = vadd.f32 %v155, %v263
      %v265 = vpop.f32.mrb[0].mxu0
      %266 = vmatprep.mubr.f32.mxu0 0.0
      %267 = vmatmul.mubr.f32.gmra.mrb[0].mxu0 %v127
      %v268 = vpop.f32.mrb[0].mxu0
      %v269 = vadd.f32 %v155, %v268
      %v270 = vpop.f32.mrb[0].mxu0
      %271 = vmatprep.mubr.f32.mxu0 0.0
      %272 = vmatmul.mubr.f32.gmra.mrb[0].mxu0 %v128
      %v273 = vpop.f32.mrb[0].mxu0
      %v274 = vadd.f32 %v155, %v273
      %v275 = vpop.f32.mrb[0].mxu0
      %276 = vmatprep.mubr.f32.mxu0 0.0
      %277 = vmatmul.mubr.f32.gmra.mrb[0].mxu0 %v129
      %v278 = vpop.f32.mrb[0].mxu0
      %v279 = vadd.f32 %v155, %v278
      %v280 = vpop.f32.mrb[0].mxu0
      %281 = vmatprep.mubr.f32.mxu0 0.0
      %282 = vmatmul.mubr.f32.gmra.mrb[0].mxu0 %v130
      %v283 = vpop.f32.mrb[0].mxu0
      %v284 = vadd.f32 %v155, %v283
      %v285 = vpop.f32.mrb[0].mxu0
      %286 = vmatprep.mubr.f32.mxu0 0.0
      %287 = vmatmul.mubr.f32.gmra.mrb[0].mxu0 %v131
      %v288 = vpop.f32.mrb[0].mxu0
      %v289 = vadd.f32 %v155, %v288
      %v290 = vpop.f32.mrb[0].mxu0
      %291 = vmatprep.mubr.f32.mxu0 0.0
      %292 = vmatmul.mubr.f32.gmra.mrb[0].mxu0 %v132
      %v293 = vpop.f32.mrb[0].mxu0
      %v294 = vadd.f32 %v155, %v293
      %v295 = vpop.f32.mrb[0].mxu0
      %296 = vmatprep.mubr.f32.mxu0 0.0
      %297 = vmatmul.mubr.f32.gmra.mrb[0].mxu0 %v133
      %v298 = vpop.f32.mrb[0].mxu0
      %v299 = vadd.f32 %v155, %v298
      %v300 = vpop.f32.mrb[0].mxu0
      %301 = vdwg.mxu0
      %302 = vst [vmem:[#allocation3] sm:$0xff] %v224
      %303 = vst [vmem:[#allocation3 + $0x8] sm:$0xff] %v229
      %304 = vst [vmem:[#allocation3 + $0x10] sm:$0xff] %v234
      %305 = vst [vmem:[#allocation3 + $0x18] sm:$0xff] %v239
      %306 = vst [vmem:[#allocation3 + $0x20] sm:$0xff] %v244
      %307 = vst [vmem:[#allocation3 + $0x28] sm:$0xff] %v249
      %308 = vst [vmem:[#allocation3 + $0x30] sm:$0xff] %v254
      %309 = vst [vmem:[#allocation3 + $0x38] sm:$0xff] %v259
      %310 = vst [vmem:[#allocation3 + $0x40] sm:$0xff] %v264
      %311 = vst [vmem:[#allocation3 + $0x48] sm:$0xff] %v269
      %312 = vst [vmem:[#allocation3 + $0x50] sm:$0xff] %v274
      %313 = vst [vmem:[#allocation3 + $0x58] sm:$0xff] %v279
      %314 = vst [vmem:[#allocation3 + $0x60] sm:$0xff] %v284
      %315 = vst [vmem:[#allocation3 + $0x68] sm:$0xff] %v289
      %316 = vst [vmem:[#allocation3 + $0x70] sm:$0xff] %v294
      %317 = vst [vmem:[#allocation3 + $0x78] sm:$0xff] %v299
    $region41: #{tpu_custom_call.1} parent=1 // pred_fallthru
      _
    %s318 = smul.u32 0, 128
    %v319 = vld [vmem:[#allocation4] sm:$0xff]
    %v320 = vld [vmem:[#allocation4 + $0x8] sm:$0xff]
    %v321 = vld [vmem:[#allocation4 + $0x10] sm:$0xff]
    %v322 = vld [vmem:[#allocation4 + $0x18] sm:$0xff]
    %v323 = vunpack.c.l.s8.bf16 %v319
    %v324 = vunpack.c.h.s8.bf16 %v319
    %v325 = vunpack.c.l.s8.bf16 %v320
    %v326 = vunpack.c.h.s8.bf16 %v320
    %v327 = vunpack.c.l.s8.bf16 %v321
    %v328 = vunpack.c.h.s8.bf16 %v321
    %v329 = vunpack.c.l.s8.bf16 %v322
    %v330 = vunpack.c.h.s8.bf16 %v322
    %s331 = sshra.s32 %s318, 3
    %s332 = sand.u32 %s318, 7
    %s333 = smul.addr %s331, 4
    %s334 = scalar_lea.vmem [#allocation7], %s333
    %v335 = vld [vmem:[%s334] sm:$0xf]
    %v336 = vld [vmem:[%s334 + $0x4] sm:$0xf]
    %v337 = vld [vmem:[%s334 + $0x8] sm:$0xf]
    %v338 = vld [vmem:[%s334 + $0xc] sm:$0xf]
    %v339 = vld [vmem:[%s334 + $0x10] sm:$0xf]
    %v340 = vld [vmem:[%s334 + $0x14] sm:$0xf]
    %v341 = vld [vmem:[%s334 + $0x18] sm:$0xf]
    %v342 = vld [vmem:[%s334 + $0x1c] sm:$0xf]
    %v343 = vld [vmem:[%s334 + $0x20] sm:$0xf]
    %v344 = vld [vmem:[%s334 + $0x24] sm:$0xf]
    %v345 = vld [vmem:[%s334 + $0x28] sm:$0xf]
    %v346 = vld [vmem:[%s334 + $0x2c] sm:$0xf]
    %v347 = vld [vmem:[%s334 + $0x30] sm:$0xf]
    %v348 = vld [vmem:[%s334 + $0x34] sm:$0xf]
    %v349 = vld [vmem:[%s334 + $0x38] sm:$0xf]
    %v350 = vld [vmem:[%s334 + $0x3c] sm:$0xf]
    %v351 = vld [vmem:[#allocation2] sm:$0xff]
    %v352 = vld [vmem:[#allocation2 + $0x8] sm:$0xff]
    %v353 = vld [vmem:[#allocation2 + $0x10] sm:$0xff]
    %v354 = vld [vmem:[#allocation2 + $0x18] sm:$0xff]
    %v355 = vld [vmem:[#allocation2 + $0x20] sm:$0xff]
    %v356 = vld [vmem:[#allocation2 + $0x28] sm:$0xff]
    %v357 = vld [vmem:[#allocation2 + $0x30] sm:$0xff]
    %v358 = vld [vmem:[#allocation2 + $0x38] sm:$0xff]
    %v359 = vld [vmem:[#allocation2 + $0x40] sm:$0xff]
    %v360 = vld [vmem:[#allocation2 + $0x48] sm:$0xff]
    %v361 = vld [vmem:[#allocation2 + $0x50] sm:$0xff]
    %v362 = vld [vmem:[#allocation2 + $0x58] sm:$0xff]
    %v363 = vld [vmem:[#allocation2 + $0x60] sm:$0xff]
    %v364 = vld [vmem:[#allocation2 + $0x68] sm:$0xff]
    %v365 = vld [vmem:[#allocation2 + $0x70] sm:$0xff]
    %v366 = vld [vmem:[#allocation2 + $0x78] sm:$0xff]
    %v383 = vunpack.c.l.b16 %v335
    %v384 = vunpack.c.l.b16 %v336
    %v385 = vunpack.c.l.b16 %v337
    %v386 = vunpack.c.l.b16 %v338
    %v387 = vunpack.c.l.b16 %v339
    %v388 = vunpack.c.l.b16 %v340
    %v389 = vunpack.c.l.b16 %v341
    %v390 = vunpack.c.l.b16 %v342
    %v391 = vunpack.c.l.b16 %v343
    %v392 = vunpack.c.l.b16 %v344
    %v393 = vunpack.c.l.b16 %v345
    %v394 = vunpack.c.l.b16 %v346
    %v395 = vunpack.c.l.b16 %v347
    %v396 = vunpack.c.l.b16 %v348
    %v397 = vunpack.c.l.b16 %v349
    %v398 = vunpack.c.l.b16 %v350
    %v399 = vpack.c.b16 %v384, %v383
    %v400 = vpack.c.b16 %v386, %v385
    %v401 = vpack.c.b16 %v388, %v387
    %v402 = vpack.c.b16 %v390, %v389
    %v403 = vpack.c.b16 %v392, %v391
    %v404 = vpack.c.b16 %v394, %v393
    %v405 = vpack.c.b16 %v396, %v395
    %v406 = vpack.c.b16 %v398, %v397
    %415 = vmatprep.subr.bf16.mxu0 0
    %416 = vmatpush1.bf16.msra.mxu0 %v399
    %417 = vmatprep.subr.bf16.mxu0 0
    %418 = vmatpush1.bf16.msra.mxu0 %v400
    %419 = vmatprep.subr.bf16.mxu0 0
    %420 = vmatpush1.bf16.msra.mxu0 %v401
    %421 = vmatprep.subr.bf16.mxu0 0
    %422 = vmatpush1.bf16.msra.mxu0 %v402
    %423 = vmatprep.subr.bf16.mxu0 0
    %424 = vmatpush1.bf16.msra.mxu0 %v403
    %425 = vmatprep.subr.bf16.mxu0 0
    %426 = vmatpush1.bf16.msra.mxu0 %v404
    %427 = vmatprep.subr.bf16.mxu0 0
    %428 = vmatpush1.bf16.msra.mxu0 %v405
    %429 = vmatprep.subr.bf16.mxu0 0
    %430 = vmatpush1.bf16.msra.mxu0 %v406
    %431 = vmatprep.subr.bf16.mxu0 0
    %432 = vmatpush1.bf16.msra.mxu0 0
    %433 = vmatprep.subr.bf16.mxu0 0
    %434 = vmatpush1.bf16.msra.mxu0 0
    %435 = vmatprep.subr.bf16.mxu0 0
    %436 = vmatpush1.bf16.msra.mxu0 0
    %437 = vmatprep.subr.bf16.mxu0 0
    %438 = vmatpush1.bf16.msra.mxu0 0
    %439 = vmatprep.subr.bf16.mxu0 0
    %440 = vmatpush1.bf16.msra.mxu0 0
    %441 = vmatprep.subr.bf16.mxu0 0
    %442 = vmatpush1.bf16.msra.mxu0 0
    %443 = vmatprep.subr.bf16.mxu0 0
    %444 = vmatpush1.bf16.msra.mxu0 0
    %445 = vmatprep.subr.bf16.mxu0 0
    %446 = vmatpush1.bf16.msra.mxu0 0
    %447 = vmatprep.mubr.bf16.mxu0 0
    %448 = vmatmul.mubr.bf16.gmra.mrb[0].mxu0 %v323
    %v449 = vpop.f32.mrb[0].mxu0
    %v450 = vadd.f32 0.0, %v449
    %v451 = vpop.f32.mrb[0].mxu0
    %v452 = vpop.f32.mrb[0].mxu0
    %v453 = vadd.f32 0.0, %v452
    %v454 = vpop.f32.mrb[0].mxu0
    %455 = vmatprep.mubr.bf16.mxu0 0
    %456 = vmatmul.mubr.bf16.gmra.mrb[0].mxu0 %v324
    %v457 = vpop.f32.mrb[0].mxu0
    %v458 = vadd.f32 0.0, %v457
    %v459 = vpop.f32.mrb[0].mxu0
    %v460 = vpop.f32.mrb[0].mxu0
    %v461 = vadd.f32 0.0, %v460
    %v462 = vpop.f32.mrb[0].mxu0
    %463 = vmatprep.mubr.bf16.mxu0 0
    %464 = vmatmul.mubr.bf16.gmra.mrb[0].mxu0 %v325
    %v465 = vpop.f32.mrb[0].mxu0
    %v466 = vadd.f32 0.0, %v465
    %v467 = vpop.f32.mrb[0].mxu0
    %v468 = vpop.f32.mrb[0].mxu0
    %v469 = vadd.f32 0.0, %v468
    %v470 = vpop.f32.mrb[0].mxu0
    %471 = vmatprep.mubr.bf16.mxu0 0
    %472 = vmatmul.mubr.bf16.gmra.mrb[0].mxu0 %v326
    %v473 = vpop.f32.mrb[0].mxu0
    %v474 = vadd.f32 0.0, %v473
    %v475 = vpop.f32.mrb[0].mxu0
    %v476 = vpop.f32.mrb[0].mxu0
    %v477 = vadd.f32 0.0, %v476
    %v478 = vpop.f32.mrb[0].mxu0
    %479 = vmatprep.mubr.bf16.mxu0 0
    %480 = vmatmul.mubr.bf16.gmra.mrb[0].mxu0 %v327
    %v481 = vpop.f32.mrb[0].mxu0
    %v482 = vadd.f32 0.0, %v481
    %v483 = vpop.f32.mrb[0].mxu0
    %v484 = vpop.f32.mrb[0].mxu0
    %v485 = vadd.f32 0.0, %v484
    %v486 = vpop.f32.mrb[0].mxu0
    %487 = vmatprep.mubr.bf16.mxu0 0
    %488 = vmatmul.mubr.bf16.gmra.mrb[0].mxu0 %v328
    %v489 = vpop.f32.mrb[0].mxu0
    %v490 = vadd.f32 0.0, %v489
    %v491 = vpop.f32.mrb[0].mxu0
    %v492 = vpop.f32.mrb[0].mxu0
    %v493 = vadd.f32 0.0, %v492
    %v494 = vpop.f32.mrb[0].mxu0
    %495 = vmatprep.mubr.bf16.mxu0 0
    %496 = vmatmul.mubr.bf16.gmra.mrb[0].mxu0 %v329
    %v497 = vpop.f32.mrb[0].mxu0
    %v498 = vadd.f32 0.0, %v497
    %v499 = vpop.f32.mrb[0].mxu0
    %v500 = vpop.f32.mrb[0].mxu0
    %v501 = vadd.f32 0.0, %v500
    %v502 = vpop.f32.mrb[0].mxu0
    %503 = vmatprep.mubr.bf16.mxu0 0
    %504 = vmatmul.mubr.bf16.gmra.mrb[0].mxu0 %v330
    %v505 = vpop.f32.mrb[0].mxu0
    %v506 = vadd.f32 0.0, %v505
    %v507 = vpop.f32.mrb[0].mxu0
    %v508 = vpop.f32.mrb[0].mxu0
    %v509 = vadd.f32 0.0, %v508
    %v510 = vpop.f32.mrb[0].mxu0
    %511 = vdwg.mxu0
    %v512 = vadd.f32 %v351, %v450
    %v513 = vadd.f32 %v352, %v453
    %v514 = vadd.f32 %v353, %v458
    %v515 = vadd.f32 %v354, %v461
    %v516 = vadd.f32 %v355, %v466
    %v517 = vadd.f32 %v356, %v469
    %v518 = vadd.f32 %v357, %v474
    %v519 = vadd.f32 %v358, %v477
    %v520 = vadd.f32 %v359, %v482
    %v521 = vadd.f32 %v360, %v485
    %v522 = vadd.f32 %v361, %v490
    %v523 = vadd.f32 %v362, %v493
    %v524 = vadd.f32 %v363, %v498
    %v525 = vadd.f32 %v364, %v501
    %v526 = vadd.f32 %v365, %v506
    %v527 = vadd.f32 %v366, %v509
    %528 = vst [vmem:[#allocation2] sm:$0xff] %v512
    %529 = vst [vmem:[#allocation2 + $0x8] sm:$0xff] %v513
    %530 = vst [vmem:[#allocation2 + $0x10] sm:$0xff] %v514
    %531 = vst [vmem:[#allocation2 + $0x18] sm:$0xff] %v515
    %532 = vst [vmem:[#allocation2 + $0x20] sm:$0xff] %v516
    %533 = vst [vmem:[#allocation2 + $0x28] sm:$0xff] %v517
    %534 = vst [vmem:[#allocation2 + $0x30] sm:$0xff] %v518
    %535 = vst [vmem:[#allocation2 + $0x38] sm:$0xff] %v519
    %536 = vst [vmem:[#allocation2 + $0x40] sm:$0xff] %v520
    %537 = vst [vmem:[#allocation2 + $0x48] sm:$0xff] %v521
    %538 = vst [vmem:[#allocation2 + $0x50] sm:$0xff] %v522
    %539 = vst [vmem:[#allocation2 + $0x58] sm:$0xff] %v523
    %540 = vst [vmem:[#allocation2 + $0x60] sm:$0xff] %v524
    %541 = vst [vmem:[#allocation2 + $0x68] sm:$0xff] %v525
    %542 = vst [vmem:[#allocation2 + $0x70] sm:$0xff] %v526
    %543 = vst [vmem:[#allocation2 + $0x78] sm:$0xff] %v527
    // Predicated region
    $region42: #{tpu_custom_call.1} parent=1 // pred_check
      %p544 = pneg %p77
    $region43: #{tpu_custom_call.1} parent=1 // pred_check_branch
      %546 = sbr.rel (%p544) target = $region45
    $region44: #{tpu_custom_call.1} parent=1 // pred_region
      %v547 = vld [vmem:[#allocation2] sm:$0xff]
      %v548 = vld [vmem:[#allocation2 + $0x8] sm:$0xff]
      %v549 = vld [vmem:[#allocation2 + $0x10] sm:$0xff]
      %v550 = vld [vmem:[#allocation2 + $0x18] sm:$0xff]
      %v551 = vld [vmem:[#allocation2 + $0x20] sm:$0xff]
      %v552 = vld [vmem:[#allocation2 + $0x28] sm:$0xff]
      %v553 = vld [vmem:[#allocation2 + $0x30] sm:$0xff]
      %v554 = vld [vmem:[#allocation2 + $0x38] sm:$0xff]
      %v555 = vld [vmem:[#allocation2 + $0x40] sm:$0xff]
      %v556 = vld [vmem:[#allocation2 + $0x48] sm:$0xff]
      %v557 = vld [vmem:[#allocation2 + $0x50] sm:$0xff]
      %v558 = vld [vmem:[#allocation2 + $0x58] sm:$0xff]
      %v559 = vld [vmem:[#allocation2 + $0x60] sm:$0xff]
      %v560 = vld [vmem:[#allocation2 + $0x68] sm:$0xff]
      %v561 = vld [vmem:[#allocation2 + $0x70] sm:$0xff]
      %v562 = vld [vmem:[#allocation2 + $0x78] sm:$0xff]
      %v563 = vld [vmem:[#allocation9] sm:$0xff]
      %v564 = vld [vmem:[#allocation9 + $0x8] sm:$0xff]
      %v565 = vld [vmem:[#allocation9 + $0x10] sm:$0xff]
      %v566 = vld [vmem:[#allocation9 + $0x18] sm:$0xff]
      %v567 = vld [vmem:[#allocation9 + $0x20] sm:$0xff]
      %v568 = vld [vmem:[#allocation9 + $0x28] sm:$0xff]
      %v569 = vld [vmem:[#allocation9 + $0x30] sm:$0xff]
      %v570 = vld [vmem:[#allocation9 + $0x38] sm:$0xff]
      %v571 = vld [vmem:[#allocation9 + $0x40] sm:$0xff]
      %v572 = vld [vmem:[#allocation9 + $0x48] sm:$0xff]
      %v573 = vld [vmem:[#allocation9 + $0x50] sm:$0xff]
      %v574 = vld [vmem:[#allocation9 + $0x58] sm:$0xff]
      %v575 = vld [vmem:[#allocation9 + $0x60] sm:$0xff]
      %v576 = vld [vmem:[#allocation9 + $0x68] sm:$0xff]
      %v577 = vld [vmem:[#allocation9 + $0x70] sm:$0xff]
      %v578 = vld [vmem:[#allocation9 + $0x78] sm:$0xff]
      %v579 = vld [vmem:[#allocation3] sm:$0xff]
      %v580 = vld [vmem:[#allocation3 + $0x8] sm:$0xff]
      %v581 = vld [vmem:[#allocation3 + $0x10] sm:$0xff]
      %v582 = vld [vmem:[#allocation3 + $0x18] sm:$0xff]
      %v583 = vld [vmem:[#allocation3 + $0x20] sm:$0xff]
      %v584 = vld [vmem:[#allocation3 + $0x28] sm:$0xff]
      %v585 = vld [vmem:[#allocation3 + $0x30] sm:$0xff]
      %v586 = vld [vmem:[#allocation3 + $0x38] sm:$0xff]
      %v587 = vld [vmem:[#allocation3 + $0x40] sm:$0xff]
      %v588 = vld [vmem:[#allocation3 + $0x48] sm:$0xff]
      %v589 = vld [vmem:[#allocation3 + $0x50] sm:$0xff]
      %v590 = vld [vmem:[#allocation3 + $0x58] sm:$0xff]
      %v591 = vld [vmem:[#allocation3 + $0x60] sm:$0xff]
      %v592 = vld [vmem:[#allocation3 + $0x68] sm:$0xff]
      %v593 = vld [vmem:[#allocation3 + $0x70] sm:$0xff]
      %v594 = vld [vmem:[#allocation3 + $0x78] sm:$0xff]
      %595 = vmatprep.subr.mxu0 0.0
      %596 = vmatpush1.msra.mxu0 %v563
      %597 = vmatprep.subr.mxu0 0.0
      %598 = vmatpush1.msra.mxu0 %v564
      %599 = vmatprep.subr.mxu0 0.0
      %600 = vmatpush1.msra.mxu0 %v565
      %601 = vmatprep.subr.mxu0 0.0
      %602 = vmatpush1.msra.mxu0 %v566
      %603 = vmatprep.subr.mxu0 0.0
      %604 = vmatpush1.msra.mxu0 %v567
      %605 = vmatprep.subr.mxu0 0.0
      %606 = vmatpush1.msra.mxu0 %v568
      %607 = vmatprep.subr.mxu0 0.0
      %608 = vmatpush1.msra.mxu0 %v569
      %609 = vmatprep.subr.mxu0 0.0
      %610 = vmatpush1.msra.mxu0 %v570
      %611 = vmatprep.subr.mxu0 0.0
      %612 = vmatpush1.msra.mxu0 %v571
      %613 = vmatprep.subr.mxu0 0.0
      %614 = vmatpush1.msra.mxu0 %v572
      %615 = vmatprep.subr.mxu0 0.0
      %616 = vmatpush1.msra.mxu0 %v573
      %617 = vmatprep.subr.mxu0 0.0
      %618 = vmatpush1.msra.mxu0 %v574
      %619 = vmatprep.subr.mxu0 0.0
      %620 = vmatpush1.msra.mxu0 %v575
      %621 = vmatprep.subr.mxu0 0.0
      %622 = vmatpush1.msra.mxu0 %v576
      %623 = vmatprep.subr.mxu0 0.0
      %624 = vmatpush1.msra.mxu0 %v577
      %625 = vmatprep.subr.mxu0 0.0
      %626 = vmatpush1.msra.mxu0 %v578
      %627 = vmatprep.subr.mxu0 0.0
      %628 = vmatpush1.msra.mxu0 0.0
      %629 = vmatprep.subr.mxu0 0.0
      %630 = vmatpush1.msra.mxu0 0.0
      %631 = vmatprep.subr.mxu0 0.0
      %632 = vmatpush1.msra.mxu0 0.0
      %633 = vmatprep.subr.mxu0 0.0
      %634 = vmatpush1.msra.mxu0 0.0
      %635 = vmatprep.subr.mxu0 0.0
      %636 = vmatpush1.msra.mxu0 0.0
      %637 = vmatprep.subr.mxu0 0.0
      %638 = vmatpush1.msra.mxu0 0.0
      %639 = vmatprep.subr.mxu0 0.0
      %640 = vmatpush1.msra.mxu0 0.0
      %641 = vmatprep.subr.mxu0 0.0
      %642 = vmatpush1.msra.mxu0 0.0
      %643 = vmatprep.subr.mxu0 0.0
      %644 = vmatpush1.msra.mxu0 0.0
      %645 = vmatprep.subr.mxu0 0.0
      %646 = vmatpush1.msra.mxu0 0.0
      %647 = vmatprep.subr.mxu0 0.0
      %648 = vmatpush1.msra.mxu0 0.0
      %649 = vmatprep.subr.mxu0 0.0
      %650 = vmatpush1.msra.mxu0 0.0
      %651 = vmatprep.subr.mxu0 0.0
      %652 = vmatpush1.msra.mxu0 0.0
      %653 = vmatprep.subr.mxu0 0.0
      %654 = vmatpush1.msra.mxu0 0.0
      %655 = vmatprep.subr.mxu0 0.0
      %656 = vmatpush1.msra.mxu0 0.0
      %657 = vmatprep.subr.mxu0 0.0
      %658 = vmatpush1.msra.mxu0 0.0
      %659 = vmatprep.mubr.f32.mxu0 0.0
      %660 = vmatmul.mubr.f32.gmra.mrb[0].mxu0 %v547
      %v661 = vpop.f32.mrb[0].mxu0
      %v662 = vadd.f32 %v579, %v661
      %v663 = vpop.f32.mrb[0].mxu0
      %664 = vmatprep.mubr.f32.mxu0 0.0
      %665 = vmatmul.mubr.f32.gmra.mrb[0].mxu0 %v548
      %v666 = vpop.f32.mrb[0].mxu0
      %v667 = vadd.f32 %v580, %v666
      %v668 = vpop.f32.mrb[0].mxu0
      %669 = vmatprep.mubr.f32.mxu0 0.0
      %670 = vmatmul.mubr.f32.gmra.mrb[0].mxu0 %v549
      %v671 = vpop.f32.mrb[0].mxu0
      %v672 = vadd.f32 %v581, %v671
      %v673 = vpop.f32.mrb[0].mxu0
      %674 = vmatprep.mubr.f32.mxu0 0.0
      %675 = vmatmul.mubr.f32.gmra.mrb[0].mxu0 %v550
      %v676 = vpop.f32.mrb[0].mxu0
      %v677 = vadd.f32 %v582, %v676
      %v678 = vpop.f32.mrb[0].mxu0
      %679 = vmatprep.mubr.f32.mxu0 0.0
      %680 = vmatmul.mubr.f32.gmra.mrb[0].mxu0 %v551
      %v681 = vpop.f32.mrb[0].mxu0
      %v682 = vadd.f32 %v583, %v681
      %v683 = vpop.f32.mrb[0].mxu0
      %684 = vmatprep.mubr.f32.mxu0 0.0
      %685 = vmatmul.mubr.f32.gmra.mrb[0].mxu0 %v552
      %v686 = vpop.f32.mrb[0].mxu0
      %v687 = vadd.f32 %v584, %v686
      %v688 = vpop.f32.mrb[0].mxu0
      %689 = vmatprep.mubr.f32.mxu0 0.0
      %690 = vmatmul.mubr.f32.gmra.mrb[0].mxu0 %v553
      %v691 = vpop.f32.mrb[0].mxu0
      %v692 = vadd.f32 %v585, %v691
      %v693 = vpop.f32.mrb[0].mxu0
      %694 = vmatprep.mubr.f32.mxu0 0.0
      %695 = vmatmul.mubr.f32.gmra.mrb[0].mxu0 %v554
      %v696 = vpop.f32.mrb[0].mxu0
      %v697 = vadd.f32 %v586, %v696
      %v698 = vpop.f32.mrb[0].mxu0
      %699 = vmatprep.mubr.f32.mxu0 0.0
      %700 = vmatmul.mubr.f32.gmra.mrb[0].mxu0 %v555
      %v701 = vpop.f32.mrb[0].mxu0
      %v702 = vadd.f32 %v587, %v701
      %v703 = vpop.f32.mrb[0].mxu0
      %704 = vmatprep.mubr.f32.mxu0 0.0
      %705 = vmatmul.mubr.f32.gmra.mrb[0].mxu0 %v556
      %v706 = vpop.f32.mrb[0].mxu0
      %v707 = vadd.f32 %v588, %v706
      %v708 = vpop.f32.mrb[0].mxu0
      %709 = vmatprep.mubr.f32.mxu0 0.0
      %710 = vmatmul.mubr.f32.gmra.mrb[0].mxu0 %v557
      %v711 = vpop.f32.mrb[0].mxu0
      %v712 = vadd.f32 %v589, %v711
      %v713 = vpop.f32.mrb[0].mxu0
      %714 = vmatprep.mubr.f32.mxu0 0.0
      %715 = vmatmul.mubr.f32.gmra.mrb[0].mxu0 %v558
      %v716 = vpop.f32.mrb[0].mxu0
      %v717 = vadd.f32 %v590, %v716
      %v718 = vpop.f32.mrb[0].mxu0
      %719 = vmatprep.mubr.f32.mxu0 0.0
      %720 = vmatmul.mubr.f32.gmra.mrb[0].mxu0 %v559
      %v721 = vpop.f32.mrb[0].mxu0
      %v722 = vadd.f32 %v591, %v721
      %v723 = vpop.f32.mrb[0].mxu0
      %724 = vmatprep.mubr.f32.mxu0 0.0
      %725 = vmatmul.mubr.f32.gmra.mrb[0].mxu0 %v560
      %v726 = vpop.f32.mrb[0].mxu0
      %v727 = vadd.f32 %v592, %v726
      %v728 = vpop.f32.mrb[0].mxu0
      %729 = vmatprep.mubr.f32.mxu0 0.0
      %730 = vmatmul.mubr.f32.gmra.mrb[0].mxu0 %v561
      %v731 = vpop.f32.mrb[0].mxu0
      %v732 = vadd.f32 %v593, %v731
      %v733 = vpop.f32.mrb[0].mxu0
      %734 = vmatprep.mubr.f32.mxu0 0.0
      %735 = vmatmul.mubr.f32.gmra.mrb[0].mxu0 %v562
      %v736 = vpop.f32.mrb[0].mxu0
      %v737 = vadd.f32 %v594, %v736
      %v738 = vpop.f32.mrb[0].mxu0
      %739 = vdwg.mxu0
      %v740 = vmax.f32 %v662, 0.0
      %v741 = vmax.f32 %v667, 0.0
      %v742 = vmax.f32 %v672, 0.0
      %v743 = vmax.f32 %v677, 0.0
      %v744 = vmax.f32 %v682, 0.0
      %v745 = vmax.f32 %v687, 0.0
      %v746 = vmax.f32 %v692, 0.0
      %v747 = vmax.f32 %v697, 0.0
      %v748 = vmax.f32 %v702, 0.0
      %v749 = vmax.f32 %v707, 0.0
      %v750 = vmax.f32 %v712, 0.0
      %v751 = vmax.f32 %v717, 0.0
      %v752 = vmax.f32 %v722, 0.0
      %v753 = vmax.f32 %v727, 0.0
      %v754 = vmax.f32 %v732, 0.0
      %v755 = vmax.f32 %v737, 0.0
      %v756 = vpack.c.bf16 %v741, %v740
      %v757 = vpack.c.bf16 %v743, %v742
      %v758 = vpack.c.bf16 %v745, %v744
      %v759 = vpack.c.bf16 %v747, %v746
      %v760 = vpack.c.bf16 %v749, %v748
      %v761 = vpack.c.bf16 %v751, %v750
      %v762 = vpack.c.bf16 %v753, %v752
      %v763 = vpack.c.bf16 %v755, %v754
      %v772 = vunpack.c.l.b16 %v756
      %v773 = vunpack.c.h.b16 %v756
      %v774 = vunpack.c.l.b16 %v757
      %v775 = vunpack.c.h.b16 %v757
      %v776 = vunpack.c.l.b16 %v758
      %v777 = vunpack.c.h.b16 %v758
      %v778 = vunpack.c.l.b16 %v759
      %v779 = vunpack.c.h.b16 %v759
      %v780 = vunpack.c.l.b16 %v760
      %v781 = vunpack.c.h.b16 %v760
      %v782 = vunpack.c.l.b16 %v761
      %v783 = vunpack.c.h.b16 %v761
      %v784 = vunpack.c.l.b16 %v762
      %v785 = vunpack.c.h.b16 %v762
      %v786 = vunpack.c.l.b16 %v763
      %v787 = vunpack.c.h.b16 %v763
      %v788 = vpack.c.b16 %v772, %v772
      %v789 = vpack.c.b16 %v773, %v773
      %v790 = vpack.c.b16 %v774, %v774
      %v791 = vpack.c.b16 %v775, %v775
      %v792 = vpack.c.b16 %v776, %v776
      %v793 = vpack.c.b16 %v777, %v777
      %v794 = vpack.c.b16 %v778, %v778
      %v795 = vpack.c.b16 %v779, %v779
      %v796 = vpack.c.b16 %v780, %v780
      %v797 = vpack.c.b16 %v781, %v781
      %v798 = vpack.c.b16 %v782, %v782
      %v799 = vpack.c.b16 %v783, %v783
      %v800 = vpack.c.b16 %v784, %v784
      %v801 = vpack.c.b16 %v785, %v785
      %v802 = vpack.c.b16 %v786, %v786
      %v803 = vpack.c.b16 %v787, %v787
      %820 = vst [vmem:[#allocation12] sm:$0xf] %v788
      %821 = vst [vmem:[#allocation12 + $0x4] sm:$0xf] %v789
      %822 = vst [vmem:[#allocation12 + $0x8] sm:$0xf] %v790
      %823 = vst [vmem:[#allocation12 + $0xc] sm:$0xf] %v791
      %824 = vst [vmem:[#allocation12 + $0x10] sm:$0xf] %v792
      %825 = vst [vmem:[#allocation12 + $0x14] sm:$0xf] %v793
      %826 = vst [vmem:[#allocation12 + $0x18] sm:$0xf] %v794
      %827 = vst [vmem:[#allocation12 + $0x1c] sm:$0xf] %v795
      %828 = vst [vmem:[#allocation12 + $0x20] sm:$0xf] %v796
      %829 = vst [vmem:[#allocation12 + $0x24] sm:$0xf] %v797
      %830 = vst [vmem:[#allocation12 + $0x28] sm:$0xf] %v798
      %831 = vst [vmem:[#allocation12 + $0x2c] sm:$0xf] %v799
      %832 = vst [vmem:[#allocation12 + $0x30] sm:$0xf] %v800
      %833 = vst [vmem:[#allocation12 + $0x34] sm:$0xf] %v801
      %834 = vst [vmem:[#allocation12 + $0x38] sm:$0xf] %v802
      %835 = vst [vmem:[#allocation12 + $0x3c] sm:$0xf] %v803
    $region45: #{tpu_custom_call.1} parent=1 // pred_fallthru
      _
    // Predicated region
    $region46: #{tpu_custom_call.1} parent=1 // pred_check
      _
    $region47: #{tpu_custom_call.1} parent=1 // pred_check_branch
      %837 = sbr.rel (0) target = $region49
    $region48: #{tpu_custom_call.1} parent=1 // pred_region
      %s839 = ssub.s32 1024, 1024
      %840 = vsyncadd [#allocation6], %s839
      %s841 = sshll.u32 [#allocation12], 4
      %s842 = int_to_ptr.vmem [resolvable:$true] %s841
      %847 = dma.vmem_to_hbm [thread:$0]  %s842, 1024, %s5, [#allocation6], 64, 64, 4
    $region49: #{tpu_custom_call.1} parent=1 // pred_fallthru
      _
    // Predicated region
    $region50: #{tpu_custom_call.1} parent=1 // pred_check
      _
    $region51: #{tpu_custom_call.1} parent=1 // pred_check_branch
      %849 = sbr.rel (0) target = $region53
    $region52: #{tpu_custom_call.1} parent=1 // pred_region
      %850 = dma.done [#allocation6], 1024
    $region53: #{tpu_custom_call.1} parent=1 // pred_fallthru
      _
    %851 = vsyncpa [#allocation5], 1
    %852 = vsyncpa [#allocation8], 1
    %853 = vsyncpa [#allocation11], 1
    %854 = vsyncpa [#allocation6], 1

</llo_original>
